<compile_context>
chip_gen: v7x
topology: tpu7x:2x2x1
jax: 0.10.0
libtpu: 0.0.40
codegen_flags: <defaults>
</compile_context>

<pallas_src>
import functools

import numpy as np
import jax
import jax.numpy as jnp
from jax.experimental import pallas as pl
from jax.experimental.pallas import tpu as pltpu

_BOXCOF = 2.0
_FLOWCOF = 2.0
_VMEM_LIMIT = 48 * 1024 * 1024  # <= v7x per-TC VMEM, generous on v5e/v6e.


def _choose_tiling(sr, cap=1024, mult=16):
    """Spatial-row tiling: (tile_rows, num_tiles, padded_rows).

    tile_rows is a multiple of 16 (keeps bf16 (16,128) sublane packing unmasked)
    and soft-capped; padded_rows = num_tiles * tile_rows (padding is neutral)."""
    n_s = max(1, -(-sr // cap))          # ceil(sr / cap)
    tr = -(-sr // n_s)                   # ceil(sr / n_s)
    tr = -(-tr // mult) * mult           # round up to multiple of 16
    return tr, n_s, n_s * tr


# ---------------------------------------------------------------------------
# Pass A: per-flow-batch affine coefficients for the normalised flow magnitude.
#   weight(rad) = flowcof * (1 + (rad - min)/(max - min)) = scale*rad + offset
# ---------------------------------------------------------------------------
def _flow_coef_kernel(flow_ref, coef_ref, mn_ref, mx_ref, *, flowcof):
    s = pl.program_id(1)
    n_s = pl.num_programs(1)

    u = flow_ref[0, 0].astype(jnp.float32)          # (TR, 128)
    v = flow_ref[0, 1].astype(jnp.float32)
    rad = u * u + v * v

    @pl.when(s == 0)
    def _():
        mn_ref[...] = jnp.full((1, 128), jnp.inf, dtype=jnp.float32)
        mx_ref[...] = jnp.full((1, 128), -jnp.inf, dtype=jnp.float32)

    mn_ref[...] = jnp.minimum(mn_ref[...], jnp.min(rad, axis=0, keepdims=True))
    mx_ref[...] = jnp.maximum(mx_ref[...], jnp.max(rad, axis=0, keepdims=True))

    @pl.when(s == n_s - 1)
    def _():
        mn = jnp.min(mn_ref[...], axis=1, keepdims=True)   # (1, 1)
        mx = jnp.max(mx_ref[...], axis=1, keepdims=True)   # (1, 1)
        # NOTE: mx == mn (constant flow) -> inf/nan, same as the PyTorch module.
        scale = flowcof / (mx - mn)
        offset = flowcof - scale * mn
        coef_ref[0, 0:1, :] = jnp.broadcast_to(scale, (1, 128))
        coef_ref[0, 1:2, :] = jnp.broadcast_to(offset, (1, 128))


# ---------------------------------------------------------------------------
# Pass A': combined weight map  W = box * (scale*rad + offset)  (bf16 by default)
# ---------------------------------------------------------------------------
def _weight_map_kernel(flow_ref, box_ref, coef_ref, w_ref):
    u = flow_ref[0, 0].astype(jnp.float32)          # (TR, 128)
    v = flow_ref[0, 1].astype(jnp.float32)
    rad = u * u + v * v
    scale = coef_ref[0, 0:1, :]                     # (1, 128), lanes all equal
    offset = coef_ref[0, 1:2, :]                    # (1, 128)
    w_ref[0, :, :] = (box_ref[...] * (rad * scale + offset)).astype(w_ref.dtype)


# ---------------------------------------------------------------------------
# Pass B: streaming weighted-difference reduction with deferred weight multiply.
# grid = (C * n_split, spatial_tiles, B): leading axis parallel, rest reduction.
# ---------------------------------------------------------------------------
def _object_loss_kernel(out_ref, tgt_ref, w_ref, o_ref, part_ref, acc_ref, *, l_num):
    s = pl.program_id(1)
    b = pl.program_id(2)
    n_s = pl.num_programs(1)
    n_b = pl.num_programs(2)

    @pl.when(jnp.logical_and(s == 0, b == 0))
    def _():
        acc_ref[...] = jnp.zeros_like(acc_ref)

    @pl.when(b == 0)
    def _():
        part_ref[...] = jnp.zeros_like(part_ref)

    x = out_ref[0, 0].astype(jnp.float32)           # (TR, 128)
    t = tgt_ref[0, 0].astype(jnp.float32)
    d = x - t
    if l_num == 2:
        diff = d * d                                # abs redundant for even power
    elif isinstance(l_num, int) and l_num >= 1:
        p = d
        for _ in range(l_num - 1):                  # VALU mul chain, no EUP pow
            p = p * d
        diff = jnp.abs(p) if (l_num % 2 == 1) else p
    else:
        diff = jnp.abs(d ** l_num)

    part_ref[...] += diff                           # unweighted accumulation over b

    @pl.when(b == n_b - 1)
    def _():
        # Deferred weight multiply: one W load + one mul per (channel, tile).
        acc_ref[...] += w_ref[0].astype(jnp.float32) * part_ref[...]

    @pl.when(jnp.logical_and(s == n_s - 1, b == n_b - 1))
    def _():
        row = jnp.sum(acc_ref[...], axis=0, keepdims=True)   # (1, 128)
        o_ref[0, :, :] = jnp.broadcast_to(row, (8, 128))      # lane-dense store


# ---------------------------------------------------------------------------
# Wrapper
# ---------------------------------------------------------------------------
def object_loss(outputs, target, flow, bboxes, *, l_num=2, dynamic=False,
                weight_dtype=jnp.bfloat16, tile_rows_cap=1024):
    B, C, H, W = outputs.shape
    Bf = flow.shape[0]
    assert flow.shape[1] == 2, "flow must have 2 channels (u, v)"
    assert target.shape == outputs.shape
    # torch.mul(cof(•,H,W), diff(B,C,H,W)) right-aligns -> requires Bf == C or Bf == 1.
    assert Bf == C or Bf == 1, (
        "broadcast of cof against outputs requires flow batch == channels "
        "(or flow batch == 1)")

    S = H * W
    SR = pl.cdiv(S, 128)
    TR, n_s_total, SR_pad = _choose_tiling(SR, cap=tile_rows_cap)
    S_pad = SR_pad * 128
    pad = S_pad - S

    boxcof, flowcof = _BOXCOF, _FLOWCOF

    # Static bboxes -> host-side rasterisation of the batch-independent box map.
    box_np = np.ones((H, W), np.float32)
    for bbox in bboxes:
        x0, y0, x1, y1 = int(bbox[0]), int(bbox[1]), int(bbox[2]), int(bbox[3])
        if dynamic:
            val = 1.0 + 3500.0 / float((x1 - x0) * (y1 - y0))
        else:
            val = 1.0 + boxcof
        box_np[y0:y1, x0:x1] = val
    box_np = np.pad(box_np.reshape(-1), (0, pad), constant_values=1.0)
    box = jnp.asarray(box_np.reshape(SR_pad, 128))

    out_flat = outputs.reshape(B, C, S)
    tgt_flat = target.reshape(B, C, S)
    flow_flat = flow.reshape(Bf, 2, S)
    if pad:
        # Zero-padded outputs/target -> padded diffs are 0 (weights stay finite),
        # edge-replicated flow -> per-batch rad min/max unchanged; dividing by the
        # true B*C*H*W keeps the mean exact.
        out_flat = jnp.pad(out_flat, ((0, 0), (0, 0), (0, pad)))
        tgt_flat = jnp.pad(tgt_flat, ((0, 0), (0, 0), (0, pad)))
        flow_flat = jnp.pad(flow_flat, ((0, 0), (0, 0), (0, pad)), mode="edge")
    out4 = out_flat.reshape(B, C, SR_pad, 128)
    tgt4 = tgt_flat.reshape(B, C, SR_pad, 128)
    flow4 = flow_flat.reshape(Bf, 2, SR_pad, 128)

    # ---- Pass A: per-flow-batch affine coefficients ----
    coefs = pl.pallas_call(
        functools.partial(_flow_coef_kernel, flowcof=flowcof),
        out_shape=jax.ShapeDtypeStruct((Bf, 2, 128), jnp.float32),
        grid_spec=pltpu.PrefetchScalarGridSpec(
            num_scalar_prefetch=0,
            grid=(Bf, n_s_total),
            in_specs=[pl.BlockSpec((1, 2, TR, 128), lambda n, s: (n, 0, s, 0))],
            out_specs=pl.BlockSpec((1, 2, 128), lambda n, s: (n, 0, 0)),
            scratch_shapes=[pltpu.VMEM((1, 128), jnp.float32),
                            pltpu.VMEM((1, 128), jnp.float32)]),
        compiler_params=pltpu.CompilerParams(
            dimension_semantics=("parallel", "arbitrary"),
            vmem_limit_bytes=_VMEM_LIMIT),
    )(flow4)

    # ---- Pass A': combined box*flow weight map (single streamed operand for Pass B) ----
    weight = pl.pallas_call(
        _weight_map_kernel,
        out_shape=jax.ShapeDtypeStruct((Bf, SR_pad, 128), weight_dtype),
        grid_spec=pltpu.PrefetchScalarGridSpec(
            num_scalar_prefetch=0,
            grid=(Bf, n_s_total),
            in_specs=[pl.BlockSpec((1, 2, TR, 128), lambda n, s: (n, 0, s, 0)),
                      pl.BlockSpec((TR, 128), lambda n, s: (s, 0)),
                      pl.BlockSpec((1, 2, 128), lambda n, s: (n, 0, 0))],
            out_specs=pl.BlockSpec((1, TR, 128), lambda n, s: (n, s, 0))),
        compiler_params=pltpu.CompilerParams(
            dimension_semantics=("parallel", "arbitrary"),
            vmem_limit_bytes=_VMEM_LIMIT),
    )(flow4, box, coefs)

    # ---- Pass B: tiled streaming weighted reduction ----
    # Megacore: when C is odd, split the spatial tiles in two so the leading
    # "parallel" axis has even extent (feeds both v7x TCs; no-op on v5e/v6e).
    n_split = 2 if (C % 2 == 1 and n_s_total % 2 == 0 and n_s_total >= 2) else 1
    n_s_local = n_s_total // n_split
    CP = C * n_split

    if n_split == 1:
        io_idx = lambda c, s, b: (b, c, s, 0)
        if Bf == C:
            w_idx = lambda c, s, b: (c, s, 0)
        else:  # Bf == 1: the single weight map broadcasts over channels
            w_idx = lambda c, s, b: (0, s, 0)
    else:
        io_idx = lambda cp, s, b: (b, cp // n_split,
                                   (cp % n_split) * n_s_local + s, 0)
        if Bf == C:
            w_idx = lambda cp, s, b: (cp // n_split,
                                      (cp % n_split) * n_s_local + s, 0)
        else:
            w_idx = lambda cp, s, b: (0, (cp % n_split) * n_s_local + s, 0)

    partials = pl.pallas_call(
        functools.partial(_object_loss_kernel, l_num=l_num),
        out_shape=jax.ShapeDtypeStruct((CP, 8, 128), jnp.float32),
        grid_spec=pltpu.PrefetchScalarGridSpec(
            num_scalar_prefetch=0,
            grid=(CP, n_s_local, B),
            in_specs=[
                pl.BlockSpec((1, 1, TR, 128), io_idx),   # outputs  (streamed)
                pl.BlockSpec((1, 1, TR, 128), io_idx),   # target   (streamed)
                pl.BlockSpec((1, TR, 128), w_idx),       # weight map (1 DMA per (c,s))
            ],
            out_specs=pl.BlockSpec((1, 8, 128), lambda *a: (a[0], 0, 0)),
            scratch_shapes=[pltpu.VMEM((TR, 128), jnp.float32),   # sum_b |d|^l
                            pltpu.VMEM((TR, 128), jnp.float32)]), # weighted acc
        compiler_params=pltpu.CompilerParams(
            dimension_semantics=("parallel", "arbitrary", "arbitrary"),
            vmem_limit_bytes=_VMEM_LIMIT),
    )(out4, tgt4, weight)

    # Final scalar: sum per-lane partials, fold the mean divisor (true element count).
    return jnp.sum(partials[:, 0, :]) * (1.0 / float(B * C * S))


# ---------------------------------------------------------------------------
# Pure-JAX reference mirroring the PyTorch forward, for verification.
# ---------------------------------------------------------------------------
def _object_loss_ref(outputs, target, flow, bboxes, *, l_num=2, dynamic=False):
    Bf = flow.shape[0]
    H, W = outputs.shape[2], outputs.shape[3]
    boxcof, flowcof = _BOXCOF, _FLOWCOF
    cof = jnp.ones((Bf, H, W), jnp.float32)
    for bbox in bboxes:
        x0, y0, x1, y1 = int(bbox[0]), int(bbox[1]), int(bbox[2]), int(bbox[3])
        val = (1.0 + 3500.0 / float((x1 - x0) * (y1 - y0))) if dynamic else (1.0 + boxcof)
        cof = cof.at[:, y0:y1, x0:x1].set(val)
    u = flow[:, 0].astype(jnp.float32)
    v = flow[:, 1].astype(jnp.float32)
    rad = (u ** 2 + v ** 2).reshape(Bf, -1)
    mn = rad.min(axis=1, keepdims=True)
    mx = rad.max(axis=1, keepdims=True)
    rad = (rad - mn) / (mx - mn)
    cof = cof * (flowcof * (1.0 + rad.reshape(Bf, H, W)))
    d = outputs.astype(jnp.float32) - target.astype(jnp.float32)
    return jnp.mean(cof * jnp.abs(d ** l_num))


if __name__ == "__main__":
    key = jax.random.PRNGKey(0)
    k1, k2, k3, k4, k5, k6 = jax.random.split(key, 6)

    # Config 1: C == flow-batch == 4 (the module's right-aligned broadcast);
    # H*W smaller than one tile -> exercises the neutral-padding path.
    B, C, H, W = 4, 4, 16, 16
    outputs = jax.random.normal(k1, (B, C, H, W), dtype=jnp.float32)
    target = jax.random.normal(k2, (B, C, H, W), dtype=jnp.float32)
    flow = jax.random.normal(k3, (C, 2, H, W), dtype=jnp.float32)
    bboxes = [(2, 3, 10, 12), (5, 1, 14, 7)]  # each bbox = (x0, y0, x1, y1)

    for dyn in (False, True):
        ref = _object_loss_ref(outputs, target, flow, bboxes, l_num=2, dynamic=dyn)
        # f32 weight map: tight structural check.
        loss32 = jax.block_until_ready(object_loss(
            outputs, target, flow, bboxes, l_num=2, dynamic=dyn,
            weight_dtype=jnp.float32))
        assert jnp.allclose(loss32, ref, rtol=1e-4, atol=1e-6), (dyn, loss32, ref)
        # bf16 weight map (default, halves weight-map HBM traffic): loose check.
        loss16 = jax.block_until_ready(object_loss(
            outputs, target, flow, bboxes, l_num=2, dynamic=dyn))
        assert jnp.allclose(loss16, ref, rtol=2e-3, atol=1e-5), (dyn, loss16, ref)

    # Config 2: single channel + single flow batch with a small tile cap ->
    # exercises the megacore spatial split, multi-tile streaming, Bf==1
    # broadcast and the l_num == 1 (abs) path.
    B2, C2, H2, W2 = 2, 1, 64, 64
    outputs2 = jax.random.normal(k4, (B2, C2, H2, W2), dtype=jnp.float32)
    target2 = jax.random.normal(k5, (B2, C2, H2, W2), dtype=jnp.float32)
    flow2 = jax.random.normal(k6, (1, 2, H2, W2), dtype=jnp.float32)
    bboxes2 = [(8, 8, 40, 48)]
    ref2 = _object_loss_ref(outputs2, target2, flow2, bboxes2, l_num=1, dynamic=False)
    loss2 = jax.block_until_ready(object_loss(
        outputs2, target2, flow2, bboxes2, l_num=1, dynamic=False,
        weight_dtype=jnp.float32, tile_rows_cap=16))
    assert jnp.allclose(loss2, ref2, rtol=1e-4, atol=1e-6), (loss2, ref2)

    print("KERNEL_OK")
</pallas_src>

<mosaic_0001>
module attributes {stable_mosaic.version = 11 : i64} {
  func.func @_flow_coef_kernel(%arg0: i32, %arg1: i32, %arg2: memref<1x2x16x128xf32, #tpu.memory_space<vmem>>, %arg3: memref<1x2x128xf32, #tpu.memory_space<vmem>>, %arg4: memref<1x128xf32, #tpu.memory_space<vmem>>, %arg5: memref<1x128xf32, #tpu.memory_space<vmem>>) attributes {dimension_semantics = [#tpu.dimension_semantics<parallel>, #tpu.dimension_semantics<arbitrary>], iteration_bounds = array<i64: 4, 1>, scalar_prefetch = 0 : i64, scratch_operands = 2 : i64, tpu.core_type = #tpu.core_type<tc>, window_params = [{transform_indices = @transform_0, window_bounds = array<i64: 1, 2, 16, 128>}, {transform_indices = @transform_1, window_bounds = array<i64: 1, 2, 128>}]} {
    %c0 = arith.constant 0 : index
    %c0_0 = arith.constant 0 : index
    %c0_1 = arith.constant 0 : index
    %c0_2 = arith.constant 0 : index
    %0 = vector.load %arg2[%c0, %c0_0, %c0_1, %c0_2] : memref<1x2x16x128xf32, #tpu.memory_space<vmem>>, vector<1x1x16x128xf32>
    %1 = vector.shape_cast %0 : vector<1x1x16x128xf32> to vector<16x128xf32>
    %c0_3 = arith.constant 0 : index
    %c1 = arith.constant 1 : index
    %c0_4 = arith.constant 0 : index
    %c0_5 = arith.constant 0 : index
    %2 = vector.load %arg2[%c0_3, %c1, %c0_4, %c0_5] : memref<1x2x16x128xf32, #tpu.memory_space<vmem>>, vector<1x1x16x128xf32>
    %3 = vector.shape_cast %2 : vector<1x1x16x128xf32> to vector<16x128xf32>
    %4 = arith.mulf %1, %1 : vector<16x128xf32>
    %5 = arith.mulf %3, %3 : vector<16x128xf32>
    %6 = arith.addf %4, %5 : vector<16x128xf32>
    %c0_i32 = arith.constant 0 : i32
    %7 = arith.cmpi eq, %arg1, %c0_i32 : i32
    %8 = arith.extui %7 : i1 to i32
    %c0_i32_6 = arith.constant 0 : i32
    %9 = arith.cmpi ne, %8, %c0_i32_6 : i32
    scf.if %9 {
      %cst_18 = arith.constant 0x7F800000 : f32
      %23 = vector.broadcast %cst_18 : f32 to vector<1x128xf32>
      %c0_19 = arith.constant 0 : index
      %c0_20 = arith.constant 0 : index
      %24 = vector.load %arg4[%c0_19, %c0_20] : memref<1x128xf32, #tpu.memory_space<vmem>>, vector<1x128xf32>
      tpu.vector_store %arg4[%c0_19, %c0_20], %23 {strides = array<i32>} : memref<1x128xf32, #tpu.memory_space<vmem>>, vector<1x128xf32>,
      %cst_21 = arith.constant 0xFF800000 : f32
      %25 = vector.broadcast %cst_21 : f32 to vector<1x128xf32>
      %c0_22 = arith.constant 0 : index
      %c0_23 = arith.constant 0 : index
      %26 = vector.load %arg5[%c0_22, %c0_23] : memref<1x128xf32, #tpu.memory_space<vmem>>, vector<1x128xf32>
      tpu.vector_store %arg5[%c0_22, %c0_23], %25 {strides = array<i32>} : memref<1x128xf32, #tpu.memory_space<vmem>>, vector<1x128xf32>,
    } else {
    }
    %c0_7 = arith.constant 0 : index
    %c0_8 = arith.constant 0 : index
    %10 = vector.load %arg4[%c0_7, %c0_8] : memref<1x128xf32, #tpu.memory_space<vmem>>, vector<1x128xf32>
    %cst = arith.constant dense<0x7F800000> : vector<128xf32>
    %11 = vector.multi_reduction <minimumf>, %6, %cst [0] : vector<16x128xf32> to vector<128xf32>
    %12 = vector.shape_cast %11 : vector<128xf32> to vector<1x128xf32>
    %13 = arith.minimumf %10, %12 : vector<1x128xf32>
    %c0_9 = arith.constant 0 : index
    %c0_10 = arith.constant 0 : index
    %14 = vector.load %arg4[%c0_9, %c0_10] : memref<1x128xf32, #tpu.memory_space<vmem>>, vector<1x128xf32>
    tpu.vector_store %arg4[%c0_9, %c0_10], %13 {strides = array<i32>} : memref<1x128xf32, #tpu.memory_space<vmem>>, vector<1x128xf32>,
    %c0_11 = arith.constant 0 : index
    %c0_12 = arith.constant 0 : index
    %15 = vector.load %arg5[%c0_11, %c0_12] : memref<1x128xf32, #tpu.memory_space<vmem>>, vector<1x128xf32>
    %cst_13 = arith.constant dense<0xFF800000> : vector<128xf32>
    %16 = vector.multi_reduction <maximumf>, %6, %cst_13 [0] : vector<16x128xf32> to vector<128xf32>
    %17 = vector.shape_cast %16 : vector<128xf32> to vector<1x128xf32>
    %18 = arith.maximumf %15, %17 : vector<1x128xf32>
    %c0_14 = arith.constant 0 : index
    %c0_15 = arith.constant 0 : index
    %19 = vector.load %arg5[%c0_14, %c0_15] : memref<1x128xf32, #tpu.memory_space<vmem>>, vector<1x128xf32>
    tpu.vector_store %arg5[%c0_14, %c0_15], %18 {strides = array<i32>} : memref<1x128xf32, #tpu.memory_space<vmem>>, vector<1x128xf32>,
    %c0_i32_16 = arith.constant 0 : i32
    %20 = arith.cmpi eq, %arg1, %c0_i32_16 : i32
    %21 = arith.extui %20 : i1 to i32
    %c0_i32_17 = arith.constant 0 : i32
    %22 = arith.cmpi ne, %21, %c0_i32_17 : i32
    scf.if %22 {
      %c0_18 = arith.constant 0 : index
      %c0_19 = arith.constant 0 : index
      %23 = vector.load %arg4[%c0_18, %c0_19] : memref<1x128xf32, #tpu.memory_space<vmem>>, vector<1x128xf32>
      %cst_20 = arith.constant dense<0x7F800000> : vector<1xf32>
      %24 = vector.multi_reduction <minimumf>, %23, %cst_20 [1] : vector<1x128xf32> to vector<1xf32>
      %25 = vector.shape_cast %24 : vector<1xf32> to vector<1x1xf32>
      %c0_21 = arith.constant 0 : index
      %c0_22 = arith.constant 0 : index
      %26 = vector.load %arg5[%c0_21, %c0_22] : memref<1x128xf32, #tpu.memory_space<vmem>>, vector<1x128xf32>
      %cst_23 = arith.constant dense<0xFF800000> : vector<1xf32>
      %27 = vector.multi_reduction <maximumf>, %26, %cst_23 [1] : vector<1x128xf32> to vector<1xf32>
      %28 = vector.shape_cast %27 : vector<1xf32> to vector<1x1xf32>
      %29 = arith.subf %28, %25 : vector<1x1xf32>
      %cst_24 = arith.constant 2.000000e+00 : f32
      %30 = vector.broadcast %cst_24 : f32 to vector<1x1xf32>
      %31 = arith.divf %30, %29 : vector<1x1xf32>
      %32 = arith.mulf %31, %25 : vector<1x1xf32>
      %cst_25 = arith.constant 2.000000e+00 : f32
      %33 = vector.broadcast %cst_25 : f32 to vector<1x1xf32>
      %34 = arith.subf %33, %32 : vector<1x1xf32>
      %35 = vector.shape_cast %31 : vector<1x1xf32> to vector<1x1xf32>
      %36 = vector.broadcast %35 : vector<1x1xf32> to vector<1x128xf32>
      %c0_26 = arith.constant 0 : index
      %c0_27 = arith.constant 0 : index
      %c0_28 = arith.constant 0 : index
      %37 = vector.load %arg3[%c0_26, %c0_27, %c0_28] : memref<1x2x128xf32, #tpu.memory_space<vmem>>, vector<1x1x128xf32>
      %38 = vector.shape_cast %37 : vector<1x1x128xf32> to vector<1x128xf32>
      %39 = vector.shape_cast %36 : vector<1x128xf32> to vector<1x1x128xf32>
      tpu.vector_store %arg3[%c0_26, %c0_27, %c0_28], %39 {strides = array<i32>} : memref<1x2x128xf32, #tpu.memory_space<vmem>>, vector<1x1x128xf32>,
      %40 = vector.shape_cast %34 : vector<1x1xf32> to vector<1x1xf32>
      %41 = vector.broadcast %40 : vector<1x1xf32> to vector<1x128xf32>
      %c0_29 = arith.constant 0 : index
      %c1_30 = arith.constant 1 : index
      %c0_31 = arith.constant 0 : index
      %42 = vector.load %arg3[%c0_29, %c1_30, %c0_31] : memref<1x2x128xf32, #tpu.memory_space<vmem>>, vector<1x1x128xf32>
      %43 = vector.shape_cast %42 : vector<1x1x128xf32> to vector<1x128xf32>
      %44 = vector.shape_cast %41 : vector<1x128xf32> to vector<1x1x128xf32>
      tpu.vector_store %arg3[%c0_29, %c1_30, %c0_31], %44 {strides = array<i32>} : memref<1x2x128xf32, #tpu.memory_space<vmem>>, vector<1x1x128xf32>,
    } else {
    }
    return
  }
  func.func @transform_0(%arg0: i32, %arg1: i32) -> (i32, i32, i32, i32) {
    %c0_i32 = arith.constant 0 : i32
    %c0_i32_0 = arith.constant 0 : i32
    %c0_i32_1 = arith.constant 0 : i32
    return %arg0, %c0_i32, %arg1, %c0_i32_0 : i32, i32, i32, i32
  }
  func.func @transform_1(%arg0: i32, %arg1: i32) -> (i32, i32, i32) {
    %c0_i32 = arith.constant 0 : i32
    %c0_i32_0 = arith.constant 0 : i32
    %c0_i32_1 = arith.constant 0 : i32
    return %arg0, %c0_i32, %c0_i32_0 : i32, i32, i32
  }
}

</mosaic_0001>

<llo_original>
// kernel: tpu_custom_call.1
$region0: #{tpu_custom_call.1}
  #allocation0 [shape = 'u32[]', space=smem, size = 0x4, offset = 0x4, fixed_abs, tag = 'smem constant byte address 0x4 - core index']
  #allocation1 [shape = 'u32[144,128]{1,0:T(1,128)}', space=vmem, size = 0x12000, scoped, tag = 'internal scratch']
  #allocation2 [shape = 'f32[1,128]{1,0:T(1,128)}', space=vmem, size = 0x200, scoped, tag = 'scratch operand']
  #allocation3 [shape = 'f32[1,128]{1,0:T(1,128)}', space=vmem, size = 0x200, scoped, tag = 'scratch operand']
  %s0 = inlined_call_operand.hbm [shape: f32[4,2,16,128], index: 0, kind: input, shape index: {}]
  %s1 = inlined_call_operand.hbm [shape: f32[4,2,128], index: 1, kind: output, shape index: {}]
  %s2 = sld [smem:[#allocation0]]
  $region49: #{tpu_custom_call.1} parent=0
    _
  %s4 = ssub.s32 1, %s2
  %s5 = scalar_select 0, %s4, %s2
  $region1: #{tpu_custom_call.1} parent=0
    #allocation4 [shape = 'u8[32768]{0}', space=vmem, size = 0x8000, scoped, tag = 'input window, operand 0']
    #allocation5 [shape = 's32[2]{0}', space=sflag, size = 0x8, scoped, tag = 'scoped memory for tpu_custom_call.1']
    #allocation6 [shape = 's32[2]{0}', space=sflag, size = 0x8, scoped, tag = 'scoped memory for tpu_custom_call.1']
    #allocation7 [shape = 'u8[2048]{0}', space=vmem, size = 0x800, scoped, tag = 'output window, operand 0']
    %6 = vsyncpa [#allocation5], 0
    %s7 = scalar_lea.sflag [#allocation5], 1
    %8 = vsyncpa %s7, 0
    %9 = vsyncpa [#allocation6], 0
    %s10 = scalar_lea.sflag [#allocation6], 1
    %11 = vsyncpa %s10, 0
    loop: start=0, step=1, limit=6
    $region2: #{tpu_custom_call.1} parent=1 // loop_pre_header
      _
    $region3: #{tpu_custom_call.1} parent=1 // loop_header
      %s13 = sphi 0, %s17
      %p14 = scmp.ge.s32.totalorder %s13, 6
      %s20 = sphi 0, %s32
      %s21 = sphi 0, %s28
      %s22 = sphi 0, %s20
      %s23 = sphi 0, %s21
      %s24 = sphi 0, %s22
      %s25 = sphi 0, %s23
      %s37 = sphi 0, %s39
      %s40 = sphi 0, %s37
      %s41 = sphi 0, %s40
      %s57 = sphi 0, %s41
      %s63 = sphi 0, %s65
      %s66 = sphi 0, %s63
      %s67 = sphi 0, %s66
      %s83 = sphi 0, %s67
    $region4: #{tpu_custom_call.1} parent=1 // loop_header_branch
      %16 = sbr.rel (%p14) target = $region8
    $region5: #{tpu_custom_call.1} parent=1 // loop_body
      %s18 = ssub.s32 %s13, 1
      %s19 = ssub.s32 %s13, 2
      %s26 = sadd.s32 1, %s21
      %p27 = scmp.ge.s32.totalorder %s26, 1
      %s28 = scalar_select %p27, 0, %s26
      %s29 = sadd.s32 1, %s20
      %s30 = scalar_select %p27, %s29, %s20
      %p31 = scmp.ge.s32.totalorder %s30, 4
      %s32 = scalar_select %p31, 0, %s30
      %s33 = ssub.s32 %s20, %s32
      %s34 = ssub.s32 %s21, %s28
      %s35 = sor.u32 %s33, %s34
      %p36 = scmp.eq.s32.totalorder %s35, 0
      %s38 = sadd.s32 %s37, 1
      %s39 = scalar_select %p36, %s37, %s38
      %p42 = pneg %p36
      %p43 = scmp.eq.s32.totalorder %s13, 3
      %p44 = por %p42, %p43
      %p45 = scmp.ne.s32.totalorder %s37, %s40
      %p46 = scmp.eq.s32.totalorder %s13, 0
      %p47 = por %p45, %p46
      %p48 = scmp.ne.s32.totalorder %s37, %s40
      %p49 = scmp.eq.s32.totalorder %s18, 3
      %p50 = por %p48, %p49
      %p51 = scmp.ne.s32.totalorder %s40, %s41
      %p52 = scmp.eq.s32.totalorder %s18, 0
      %p53 = por %p51, %p52
      %p54 = scmp.ne.s32.totalorder %s40, %s41
      %p55 = scmp.eq.s32.totalorder %s19, 3
      %p56 = por %p54, %p55
      %p58 = scmp.ne.s32.totalorder %s41, %s57
      %p59 = scmp.eq.s32.totalorder %s19, 0
      %p60 = por %p58, %p59
      %s61 = ssub.s32 %s20, %s32
      %p62 = scmp.eq.s32.totalorder %s61, 0
      %s64 = sadd.s32 %s63, 1
      %s65 = scalar_select %p62, %s63, %s64
      %p68 = pneg %p62
      %p69 = scmp.eq.s32.totalorder %s13, 3
      %p70 = por %p68, %p69
      %p71 = scmp.ne.s32.totalorder %s63, %s66
      %p72 = scmp.eq.s32.totalorder %s13, 0
      %p73 = por %p71, %p72
      %p74 = scmp.ne.s32.totalorder %s63, %s66
      %p75 = scmp.eq.s32.totalorder %s18, 3
      %p76 = por %p74, %p75
      %p77 = scmp.ne.s32.totalorder %s66, %s67
      %p78 = scmp.eq.s32.totalorder %s18, 0
      %p79 = por %p77, %p78
      %p80 = scmp.ne.s32.totalorder %s66, %s67
      %p81 = scmp.eq.s32.totalorder %s19, 3
      %p82 = por %p80, %p81
      %p84 = scmp.ne.s32.totalorder %s67, %s83
      %p85 = scmp.eq.s32.totalorder %s19, 0
      %p86 = por %p84, %p85
      %p87 = scmp.le.s32.totalorder 1, %s13
      %p88 = scmp.lt.s32.totalorder %s13, 5
      %p89 = pnand %p87, %p88
      %p90 = pneg %p89
      // Predicated region
      $region9: #{tpu_custom_call.1} parent=5 // pred_check
        _
      $region10: #{tpu_custom_call.1} parent=5 // pred_check_branch
        %92 = sbr.rel (%p89) target = $region12
      $region11: #{tpu_custom_call.1} parent=5 // pred_region
        %s93 = ssub.s32 %s13, 1
      $region12: #{tpu_custom_call.1} parent=5 // pred_fallthru
        _
      %p94 = scmp.lt.s32.totalorder %s13, 4
      // Predicated region
      $region13: #{tpu_custom_call.1} parent=5 // pred_check
        %p95 = pneg %p94
      $region14: #{tpu_custom_call.1} parent=5 // pred_check_branch
        %97 = sbr.rel (%p95) target = $region16
      $region15: #{tpu_custom_call.1} parent=5 // pred_region
        // Predicated region
        $region17: #{tpu_custom_call.1} parent=15 // pred_check
          %p98 = pneg %p47
        $region18: #{tpu_custom_call.1} parent=15 // pred_check_branch
          %100 = sbr.rel (%p98) target = $region20
        $region19: #{tpu_custom_call.1} parent=15 // pred_region
          %s101 = sand.u32 %s37, 1
          %s102 = scalar_lea.sflag [#allocation5], %s101
          %s103 = sand.u32 %s37, 1
          %s104 = smul.addr %s103, 32
          %s105 = scalar_lea.vmem [#allocation4], %s104
          %s106 = smul.u32 2, %s21
          %s108 = ssub.s32 512, 512
          %109 = vsyncadd %s102, %s108
          %s110 = smul.addr %s20, 4
          %s111 = sadd.s32 %s106, %s110
          %s112 = smul.addr %s111, 128
          %s113 = scalar_lea.hbm %s0, %s112
          %s114 = sshll.u32 %s105, 4
          %s115 = int_to_ptr.vmem [resolvable:$true] %s114
          %120 = dma.hbm_to_vmem [thread:$0]  %s113, 512, %s115, %s102, 128, 128, 8
        $region20: #{tpu_custom_call.1} parent=15 // pred_fallthru
          _
      $region16: #{tpu_custom_call.1} parent=5 // pred_fallthru
        _
      %p121 = scmp.le.s32.totalorder 1, %s13
      %p122 = scmp.lt.s32.totalorder %s13, 5
      %p123 = pnand %p121, %p122
      %p124 = pneg %p123
      // Predicated region
      $region21: #{tpu_custom_call.1} parent=5 // pred_check
        _
      $region22: #{tpu_custom_call.1} parent=5 // pred_check_branch
        %126 = sbr.rel (%p123) target = $region24
      $region23: #{tpu_custom_call.1} parent=5 // pred_region
        %s127 = ssub.s32 %s13, 1
        %s128 = sand.u32 %s40, 1
        %s129 = scalar_lea.sflag [#allocation5], %s128
        %s130 = sand.u32 %s40, 1
        %s131 = smul.addr %s130, 32
        %s132 = scalar_lea.vmem [#allocation4], %s131
        // Predicated region
        $region25: #{tpu_custom_call.1} parent=23 // pred_check
          %p133 = pneg %p53
        $region26: #{tpu_custom_call.1} parent=23 // pred_check_branch
          %135 = sbr.rel (%p133) target = $region28
        $region27: #{tpu_custom_call.1} parent=23 // pred_region
          %136 = dma.done %s129, 512
        $region28: #{tpu_custom_call.1} parent=23 // pred_fallthru
          _
        %s137 = sand.u32 %s40, 1
        %s138 = scalar_lea.sflag [#allocation5], %s137
        %s139 = sand.u32 %s40, 1
        %s140 = smul.addr %s139, 32
        %s141 = scalar_lea.vmem [#allocation4], %s140
        %p142 = pneg %p53
        %p143 = pneg %p50
        %p144 = pneg %p79
        %p145 = pneg %p76
        %s146 = sand.u32 %s66, 1
        %s147 = scalar_lea.sflag [#allocation6], %s146
        %s148 = sand.u32 %s66, 1
        %s149 = smul.addr %s148, 2
        %s150 = scalar_lea.vmem [#allocation7], %s149
        %s151 = smul.u32 2, %s23
        %v152 = vld [vmem:[%s132] sm:$0xff]
        %v153 = vld [vmem:[%s132 + $0x8] sm:$0xff]
        %s154 = scalar_lea.vmem %s132, 16 [#allocation4]
        %v155 = vld [vmem:[%s154] sm:$0xff]
        %v156 = vld [vmem:[%s154 + $0x8] sm:$0xff]
        %v157 = vmul.f32 %v152, %v152
        %v158 = vmul.f32 %v153, %v153
        %v159 = vmul.f32 %v155, %v155
        %v160 = vmul.f32 %v156, %v156
        %v161 = vadd.f32 %v157, %v159
        %v162 = vadd.f32 %v158, %v160
        %p163 = scmp.eq.s32.totalorder %s23, 0
        // Predicated region
        $region29: #{tpu_custom_call.1} parent=23 // pred_check
          %p164 = pneg %p163
        $region30: #{tpu_custom_call.1} parent=23 // pred_check_branch
          %166 = sbr.rel (%p164) target = $region32
        $region31: #{tpu_custom_call.1} parent=23 // pred_region
          %167 = vst [vmem:[#allocation2] sm:$0x1] inf
          %168 = vst [vmem:[#allocation3] sm:$0x1] -inf
        $region32: #{tpu_custom_call.1} parent=23 // pred_fallthru
          _
        %v169 = vld [vmem:[#allocation2] sm:$0x1]
        %v170 = vmin.f32 %v161, %v162
        %v171 = vrot.slane %v170, 4
        %v172 = vmin.f32 %v170, %v171
        %v173 = vrot.slane %v172, 2
        %v174 = vmin.f32 %v172, %v173
        %v175 = vrot.slane %v174, 1
        %v176 = vmin.f32 %v174, %v175
        %v177 = vmin.f32 %v169, %v176
        %178 = vst [vmem:[#allocation2] sm:$0x1] %v177
        %v179 = vld [vmem:[#allocation3] sm:$0x1]
        %v180 = vmax.f32 %v161, %v162
        %v181 = vrot.slane %v180, 4
        %v182 = vmax.f32 %v180, %v181
        %v183 = vrot.slane %v182, 2
        %v184 = vmax.f32 %v182, %v183
        %v185 = vrot.slane %v184, 1
        %v186 = vmax.f32 %v184, %v185
        %v187 = vmax.f32 %v179, %v186
        %188 = vst [vmem:[#allocation3] sm:$0x1] %v187
        // Predicated region
        $region33: #{tpu_custom_call.1} parent=23 // pred_check
          %p189 = pneg %p163
        $region34: #{tpu_custom_call.1} parent=23 // pred_check_branch
          %191 = sbr.rel (%p189) target = $region36
        $region35: #{tpu_custom_call.1} parent=23 // pred_region
          %v192 = vld [vmem:[#allocation2] sm:$0x1]
          %vm193 = vcmask 1040384
          %v194 = vsel %vm193, %v192, inf
          %195 = vmin.xlane.f32.xlu0 %v194
          %v196 = vpop.xlane.xlu0 %195
          %v197 = vld [vmem:[#allocation3] sm:$0x1]
          %v198 = vsel %vm193, %v197, -inf
          %199 = vmax.xlane.f32.xlu0 %v198
          %v200 = vpop.xlane.xlu0 %199
          %v201 = vsub.f32 %v200, %v196
          %v202 = vrcp.pop %v201
          %v203 = vmul.f32 2.0, %v202
          %v204 = vmul.f32 %v203, %v196
          %v205 = vsub.f32 2.0, %v204
          %206 = vst [vmem:[%s150] sm:$0x1] %v203
          %207 = vst [vmem:[%s150 + $0x1] sm:$0x1] %v205
        $region36: #{tpu_custom_call.1} parent=23 // pred_fallthru
          _
        %s208 = sand.u32 %s66, 1
        %s209 = scalar_lea.sflag [#allocation6], %s208
        %s210 = sand.u32 %s66, 1
        %s211 = smul.addr %s210, 2
        %s212 = scalar_lea.vmem [#allocation7], %s211
        // Predicated region
        $region37: #{tpu_custom_call.1} parent=23 // pred_check
          %p213 = pneg %p76
        $region38: #{tpu_custom_call.1} parent=23 // pred_check_branch
          %215 = sbr.rel (%p213) target = $region40
        $region39: #{tpu_custom_call.1} parent=23 // pred_region
          %s217 = ssub.s32 32, 32
          %218 = vsyncadd %s209, %s217
          %s219 = smul.addr %s22, 32
          %s220 = scalar_lea.hbm %s1, %s219
          %s222 = sshll.u32 %s212, 4
          %s223 = int_to_ptr.vmem [resolvable:$true] %s222
          %225 = dma.vmem_to_hbm [thread:$0]  %s223, 32, %s220, %s209
        $region40: #{tpu_custom_call.1} parent=23 // pred_fallthru
          _
      $region24: #{tpu_custom_call.1} parent=5 // pred_fallthru
        _
      %p226 = scmp.le.s32.totalorder 2, %s13
      // Predicated region
      $region41: #{tpu_custom_call.1} parent=5 // pred_check
        %p227 = pneg %p226
      $region42: #{tpu_custom_call.1} parent=5 // pred_check_branch
        %229 = sbr.rel (%p227) target = $region44
      $region43: #{tpu_custom_call.1} parent=5 // pred_region
        %s230 = ssub.s32 %s13, 2
        // Predicated region
        $region45: #{tpu_custom_call.1} parent=43 // pred_check
          %p231 = pneg %p82
        $region46: #{tpu_custom_call.1} parent=43 // pred_check_branch
          %233 = sbr.rel (%p231) target = $region48
        $region47: #{tpu_custom_call.1} parent=43 // pred_region
          %s234 = sand.u32 %s67, 1
          %s235 = scalar_lea.sflag [#allocation6], %s234
          %s236 = sand.u32 %s67, 1
          %s237 = smul.addr %s236, 2
          %s238 = scalar_lea.vmem [#allocation7], %s237
          %239 = dma.done %s235, 32
        $region48: #{tpu_custom_call.1} parent=43 // pred_fallthru
          _
      $region44: #{tpu_custom_call.1} parent=5 // pred_fallthru
        _
    $region6: #{tpu_custom_call.1} parent=1 // loop_footer
      %s17 = sadd.s32 1, %s13
    $region7: #{tpu_custom_call.1} parent=1 // loop_footer_branch
      %12 = sbr.rel target = $region3
    $region8: #{tpu_custom_call.1} parent=1 // loop_exit
      _
    %240 = vsyncpa [#allocation5], 1
    %s241 = scalar_lea.sflag [#allocation5], 1
    %242 = vsyncpa %s241, 1
    %243 = vsyncpa [#allocation6], 1
    %s244 = scalar_lea.sflag [#allocation6], 1
    %245 = vsyncpa %s244, 1

</llo_original>
